<compile_context>
chip_gen: v7x
topology: tpu7x:2x2x1
jax: 0.10.0
libtpu: 0.0.40
codegen_flags: <defaults>
</compile_context>

<pallas_src>
import jax
import jax.numpy as jnp
from jax.experimental import pallas as pl
from jax.experimental.pallas import tpu as pltpu

DIM_INPUT = 6
DIM_HIDDEN = 6
DIM_OUTPUT = 5


def controller_kernel(x_ref, w1_ref, b1_ref, w2_ref, b2_ref, o_ref):
    # x_ref: (DIM_INPUT, TB) VMEM; w/b refs: SMEM scalars; o_ref: (DIM_OUTPUT, TB).
    x = x_ref[...]  # (DIM_INPUT, TB) f32

    # Layer 1: h_j = tanh(sum_k W1[j,k] * x[k,:] + b1[j])   -- VPU + EUP, no MXU.
    h_rows = []
    for j in range(DIM_HIDDEN):
        acc = x[0:1, :] * w1_ref[j, 0]
        for k in range(1, DIM_INPUT):
            acc = acc + x[k:k + 1, :] * w1_ref[j, k]
        h_rows.append(jnp.tanh(acc + b1_ref[j]))           # (1, TB)

    # Layer 2: y_j = sigmoid(sum_k W2[j,k] * h_k + b2[j])
    y_rows = []
    for j in range(DIM_OUTPUT):
        acc = h_rows[0] * w2_ref[j, 0]
        for k in range(1, DIM_HIDDEN):
            acc = acc + h_rows[k] * w2_ref[j, k]
        y_rows.append(jax.nn.sigmoid(acc + b2_ref[j]))      # (1, TB)

    # Single lane-dense full-block store.
    o_ref[...] = jnp.concatenate(y_rows, axis=0).astype(o_ref.dtype)


def controller_forward(x, w1, b1, w2, b2, *, tb=512):
    """x: (B, DIM_INPUT) f32. Weights in PyTorch layout:
       w1 (DIM_HIDDEN, DIM_INPUT), b1 (DIM_HIDDEN,),
       w2 (DIM_OUTPUT, DIM_HIDDEN), b2 (DIM_OUTPUT,).
       Returns (B, DIM_OUTPUT) f32."""
    B = x.shape[0]
    xt = x.T                                    # (DIM_INPUT, B) feature-major

    if B <= tb:
        TB, Bp = B, B                           # single tile == full array (OK w.r.t. (8,128) rule)
    else:
        TB = tb                                 # multiple of 128 -> lane-dense tiles
        Bp = pl.cdiv(B, TB) * TB
        if Bp != B:
            xt = jnp.pad(xt, ((0, 0), (0, Bp - B)))

    smem = pl.BlockSpec(memory_space=pltpu.MemorySpace.SMEM)

    out_t = pl.pallas_call(
        controller_kernel,
        out_shape=jax.ShapeDtypeStruct((DIM_OUTPUT, Bp), jnp.float32),
        grid=(Bp // TB,),
        in_specs=[
            pl.BlockSpec((DIM_INPUT, TB), lambda i: (0, i)),   # activations, tiled over batch
            smem,                                              # w1 resident in SMEM
            smem,                                              # b1
            smem,                                              # w2
            smem,                                              # b2
        ],
        out_specs=pl.BlockSpec((DIM_OUTPUT, TB), lambda i: (0, i)),
        compiler_params=pltpu.CompilerParams(
            dimension_semantics=("parallel",),                 # megacore sharding on v7x
        ),
    )(xt, w1, b1, w2, b2)

    return out_t[:, :B].T                        # back to (B, DIM_OUTPUT)


def init_params(key):
    """Deterministic init mirroring nn.Linear: weights (out, in), biases (out,)."""
    k1, k2, k3, k4 = jax.random.split(key, 4)
    bound1 = 1.0 / (DIM_INPUT ** 0.5)
    bound2 = 1.0 / (DIM_HIDDEN ** 0.5)
    w1 = jax.random.uniform(k1, (DIM_HIDDEN, DIM_INPUT), jnp.float32, -bound1, bound1)
    b1 = jax.random.uniform(k2, (DIM_HIDDEN,), jnp.float32, -bound1, bound1)
    w2 = jax.random.uniform(k3, (DIM_OUTPUT, DIM_HIDDEN), jnp.float32, -bound2, bound2)
    b2 = jax.random.uniform(k4, (DIM_OUTPUT,), jnp.float32, -bound2, bound2)
    return w1, b1, w2, b2


if __name__ == "__main__":
    key = jax.random.PRNGKey(0)
    k_params, k_x = jax.random.split(key)
    w1, b1, w2, b2 = init_params(k_params)

    # Small demo batch; 600 with tb=256 exercises the multi-tile grid (3 steps)
    # plus the ragged-tail padding path.
    batch = 600
    x = jax.random.normal(k_x, (batch, DIM_INPUT), jnp.float32)

    out = controller_forward(x, w1, b1, w2, b2, tb=256)
    jax.block_until_ready(out)

    # Pure-JAX reference (PyTorch semantics: y = sigmoid(tanh(x @ W1^T + b1) @ W2^T + b2)).
    ref = jax.nn.sigmoid(jnp.tanh(x @ w1.T + b1) @ w2.T + b2)
    assert out.shape == (batch, DIM_OUTPUT)
    assert jnp.allclose(out, ref, atol=1e-4, rtol=1e-4), float(jnp.max(jnp.abs(out - ref)))

    print("KERNEL_OK")
</pallas_src>

<mosaic_0001>
module attributes {stable_mosaic.version = 11 : i64} {
  func.func @controller_kernel(%arg0: i32, %arg1: memref<6x256xf32, #tpu.memory_space<vmem>>, %arg2: memref<6x6xf32, #tpu.memory_space<smem>>, %arg3: memref<6xf32, #tpu.memory_space<smem>>, %arg4: memref<5x6xf32, #tpu.memory_space<smem>>, %arg5: memref<5xf32, #tpu.memory_space<smem>>, %arg6: memref<5x256xf32, #tpu.memory_space<vmem>>) attributes {dimension_semantics = [#tpu.dimension_semantics<parallel>], iteration_bounds = array<i64: 3>, scalar_prefetch = 0 : i64, scratch_operands = 0 : i64, tpu.core_type = #tpu.core_type<tc>, window_params = [{transform_indices = @transform_0, window_bounds = array<i64: 6, 256>}, {transform_indices = @transform_1, window_bounds = array<i64: 6, 6>}, {transform_indices = @transform_2, window_bounds = array<i64: 6>}, {transform_indices = @transform_3, window_bounds = array<i64: 5, 6>}, {transform_indices = @transform_4, window_bounds = array<i64: 5>}, {transform_indices = @transform_5, window_bounds = array<i64: 5, 256>}]} {
    %c0 = arith.constant 0 : index
    %c0_0 = arith.constant 0 : index
    %0 = vector.load %arg1[%c0, %c0_0] : memref<6x256xf32, #tpu.memory_space<vmem>>, vector<6x256xf32>
    %1 = vector.extract_strided_slice %0 {offsets = [0, 0], sizes = [1, 256], strides = [1, 1]} : vector<6x256xf32> to vector<1x256xf32>
    %c0_1 = arith.constant 0 : index
    %c0_2 = arith.constant 0 : index
    %2 = memref.load %arg2[%c0_1, %c0_2] : memref<6x6xf32, #tpu.memory_space<smem>>
    %3 = vector.broadcast %2 : f32 to vector<1x256xf32>
    %4 = arith.mulf %1, %3 : vector<1x256xf32>
    %5 = vector.extract_strided_slice %0 {offsets = [1, 0], sizes = [1, 256], strides = [1, 1]} : vector<6x256xf32> to vector<1x256xf32>
    %c0_3 = arith.constant 0 : index
    %c1 = arith.constant 1 : index
    %6 = memref.load %arg2[%c0_3, %c1] : memref<6x6xf32, #tpu.memory_space<smem>>
    %7 = vector.broadcast %6 : f32 to vector<1x256xf32>
    %8 = arith.mulf %5, %7 : vector<1x256xf32>
    %9 = arith.addf %4, %8 : vector<1x256xf32>
    %10 = vector.extract_strided_slice %0 {offsets = [2, 0], sizes = [1, 256], strides = [1, 1]} : vector<6x256xf32> to vector<1x256xf32>
    %c0_4 = arith.constant 0 : index
    %c2 = arith.constant 2 : index
    %11 = memref.load %arg2[%c0_4, %c2] : memref<6x6xf32, #tpu.memory_space<smem>>
    %12 = vector.broadcast %11 : f32 to vector<1x256xf32>
    %13 = arith.mulf %10, %12 : vector<1x256xf32>
    %14 = arith.addf %9, %13 : vector<1x256xf32>
    %15 = vector.extract_strided_slice %0 {offsets = [3, 0], sizes = [1, 256], strides = [1, 1]} : vector<6x256xf32> to vector<1x256xf32>
    %c0_5 = arith.constant 0 : index
    %c3 = arith.constant 3 : index
    %16 = memref.load %arg2[%c0_5, %c3] : memref<6x6xf32, #tpu.memory_space<smem>>
    %17 = vector.broadcast %16 : f32 to vector<1x256xf32>
    %18 = arith.mulf %15, %17 : vector<1x256xf32>
    %19 = arith.addf %14, %18 : vector<1x256xf32>
    %20 = vector.extract_strided_slice %0 {offsets = [4, 0], sizes = [1, 256], strides = [1, 1]} : vector<6x256xf32> to vector<1x256xf32>
    %c0_6 = arith.constant 0 : index
    %c4 = arith.constant 4 : index
    %21 = memref.load %arg2[%c0_6, %c4] : memref<6x6xf32, #tpu.memory_space<smem>>
    %22 = vector.broadcast %21 : f32 to vector<1x256xf32>
    %23 = arith.mulf %20, %22 : vector<1x256xf32>
    %24 = arith.addf %19, %23 : vector<1x256xf32>
    %25 = vector.extract_strided_slice %0 {offsets = [5, 0], sizes = [1, 256], strides = [1, 1]} : vector<6x256xf32> to vector<1x256xf32>
    %c0_7 = arith.constant 0 : index
    %c5 = arith.constant 5 : index
    %26 = memref.load %arg2[%c0_7, %c5] : memref<6x6xf32, #tpu.memory_space<smem>>
    %27 = vector.broadcast %26 : f32 to vector<1x256xf32>
    %28 = arith.mulf %25, %27 : vector<1x256xf32>
    %29 = arith.addf %24, %28 : vector<1x256xf32>
    %c0_8 = arith.constant 0 : index
    %30 = memref.load %arg3[%c0_8] : memref<6xf32, #tpu.memory_space<smem>>
    %31 = vector.broadcast %30 : f32 to vector<1x256xf32>
    %32 = arith.addf %29, %31 : vector<1x256xf32>
    %33 = math.tanh %32 : vector<1x256xf32>
    %34 = vector.extract_strided_slice %0 {offsets = [0, 0], sizes = [1, 256], strides = [1, 1]} : vector<6x256xf32> to vector<1x256xf32>
    %c1_9 = arith.constant 1 : index
    %c0_10 = arith.constant 0 : index
    %35 = memref.load %arg2[%c1_9, %c0_10] : memref<6x6xf32, #tpu.memory_space<smem>>
    %36 = vector.broadcast %35 : f32 to vector<1x256xf32>
    %37 = arith.mulf %34, %36 : vector<1x256xf32>
    %38 = vector.extract_strided_slice %0 {offsets = [1, 0], sizes = [1, 256], strides = [1, 1]} : vector<6x256xf32> to vector<1x256xf32>
    %c1_11 = arith.constant 1 : index
    %c1_12 = arith.constant 1 : index
    %39 = memref.load %arg2[%c1_11, %c1_12] : memref<6x6xf32, #tpu.memory_space<smem>>
    %40 = vector.broadcast %39 : f32 to vector<1x256xf32>
    %41 = arith.mulf %38, %40 : vector<1x256xf32>
    %42 = arith.addf %37, %41 : vector<1x256xf32>
    %43 = vector.extract_strided_slice %0 {offsets = [2, 0], sizes = [1, 256], strides = [1, 1]} : vector<6x256xf32> to vector<1x256xf32>
    %c1_13 = arith.constant 1 : index
    %c2_14 = arith.constant 2 : index
    %44 = memref.load %arg2[%c1_13, %c2_14] : memref<6x6xf32, #tpu.memory_space<smem>>
    %45 = vector.broadcast %44 : f32 to vector<1x256xf32>
    %46 = arith.mulf %43, %45 : vector<1x256xf32>
    %47 = arith.addf %42, %46 : vector<1x256xf32>
    %48 = vector.extract_strided_slice %0 {offsets = [3, 0], sizes = [1, 256], strides = [1, 1]} : vector<6x256xf32> to vector<1x256xf32>
    %c1_15 = arith.constant 1 : index
    %c3_16 = arith.constant 3 : index
    %49 = memref.load %arg2[%c1_15, %c3_16] : memref<6x6xf32, #tpu.memory_space<smem>>
    %50 = vector.broadcast %49 : f32 to vector<1x256xf32>
    %51 = arith.mulf %48, %50 : vector<1x256xf32>
    %52 = arith.addf %47, %51 : vector<1x256xf32>
    %53 = vector.extract_strided_slice %0 {offsets = [4, 0], sizes = [1, 256], strides = [1, 1]} : vector<6x256xf32> to vector<1x256xf32>
    %c1_17 = arith.constant 1 : index
    %c4_18 = arith.constant 4 : index
    %54 = memref.load %arg2[%c1_17, %c4_18] : memref<6x6xf32, #tpu.memory_space<smem>>
    %55 = vector.broadcast %54 : f32 to vector<1x256xf32>
    %56 = arith.mulf %53, %55 : vector<1x256xf32>
    %57 = arith.addf %52, %56 : vector<1x256xf32>
    %58 = vector.extract_strided_slice %0 {offsets = [5, 0], sizes = [1, 256], strides = [1, 1]} : vector<6x256xf32> to vector<1x256xf32>
    %c1_19 = arith.constant 1 : index
    %c5_20 = arith.constant 5 : index
    %59 = memref.load %arg2[%c1_19, %c5_20] : memref<6x6xf32, #tpu.memory_space<smem>>
    %60 = vector.broadcast %59 : f32 to vector<1x256xf32>
    %61 = arith.mulf %58, %60 : vector<1x256xf32>
    %62 = arith.addf %57, %61 : vector<1x256xf32>
    %c1_21 = arith.constant 1 : index
    %63 = memref.load %arg3[%c1_21] : memref<6xf32, #tpu.memory_space<smem>>
    %64 = vector.broadcast %63 : f32 to vector<1x256xf32>
    %65 = arith.addf %62, %64 : vector<1x256xf32>
    %66 = math.tanh %65 : vector<1x256xf32>
    %67 = vector.extract_strided_slice %0 {offsets = [0, 0], sizes = [1, 256], strides = [1, 1]} : vector<6x256xf32> to vector<1x256xf32>
    %c2_22 = arith.constant 2 : index
    %c0_23 = arith.constant 0 : index
    %68 = memref.load %arg2[%c2_22, %c0_23] : memref<6x6xf32, #tpu.memory_space<smem>>
    %69 = vector.broadcast %68 : f32 to vector<1x256xf32>
    %70 = arith.mulf %67, %69 : vector<1x256xf32>
    %71 = vector.extract_strided_slice %0 {offsets = [1, 0], sizes = [1, 256], strides = [1, 1]} : vector<6x256xf32> to vector<1x256xf32>
    %c2_24 = arith.constant 2 : index
    %c1_25 = arith.constant 1 : index
    %72 = memref.load %arg2[%c2_24, %c1_25] : memref<6x6xf32, #tpu.memory_space<smem>>
    %73 = vector.broadcast %72 : f32 to vector<1x256xf32>
    %74 = arith.mulf %71, %73 : vector<1x256xf32>
    %75 = arith.addf %70, %74 : vector<1x256xf32>
    %76 = vector.extract_strided_slice %0 {offsets = [2, 0], sizes = [1, 256], strides = [1, 1]} : vector<6x256xf32> to vector<1x256xf32>
    %c2_26 = arith.constant 2 : index
    %c2_27 = arith.constant 2 : index
    %77 = memref.load %arg2[%c2_26, %c2_27] : memref<6x6xf32, #tpu.memory_space<smem>>
    %78 = vector.broadcast %77 : f32 to vector<1x256xf32>
    %79 = arith.mulf %76, %78 : vector<1x256xf32>
    %80 = arith.addf %75, %79 : vector<1x256xf32>
    %81 = vector.extract_strided_slice %0 {offsets = [3, 0], sizes = [1, 256], strides = [1, 1]} : vector<6x256xf32> to vector<1x256xf32>
    %c2_28 = arith.constant 2 : index
    %c3_29 = arith.constant 3 : index
    %82 = memref.load %arg2[%c2_28, %c3_29] : memref<6x6xf32, #tpu.memory_space<smem>>
    %83 = vector.broadcast %82 : f32 to vector<1x256xf32>
    %84 = arith.mulf %81, %83 : vector<1x256xf32>
    %85 = arith.addf %80, %84 : vector<1x256xf32>
    %86 = vector.extract_strided_slice %0 {offsets = [4, 0], sizes = [1, 256], strides = [1, 1]} : vector<6x256xf32> to vector<1x256xf32>
    %c2_30 = arith.constant 2 : index
    %c4_31 = arith.constant 4 : index
    %87 = memref.load %arg2[%c2_30, %c4_31] : memref<6x6xf32, #tpu.memory_space<smem>>
    %88 = vector.broadcast %87 : f32 to vector<1x256xf32>
    %89 = arith.mulf %86, %88 : vector<1x256xf32>
    %90 = arith.addf %85, %89 : vector<1x256xf32>
    %91 = vector.extract_strided_slice %0 {offsets = [5, 0], sizes = [1, 256], strides = [1, 1]} : vector<6x256xf32> to vector<1x256xf32>
    %c2_32 = arith.constant 2 : index
    %c5_33 = arith.constant 5 : index
    %92 = memref.load %arg2[%c2_32, %c5_33] : memref<6x6xf32, #tpu.memory_space<smem>>
    %93 = vector.broadcast %92 : f32 to vector<1x256xf32>
    %94 = arith.mulf %91, %93 : vector<1x256xf32>
    %95 = arith.addf %90, %94 : vector<1x256xf32>
    %c2_34 = arith.constant 2 : index
    %96 = memref.load %arg3[%c2_34] : memref<6xf32, #tpu.memory_space<smem>>
    %97 = vector.broadcast %96 : f32 to vector<1x256xf32>
    %98 = arith.addf %95, %97 : vector<1x256xf32>
    %99 = math.tanh %98 : vector<1x256xf32>
    %100 = vector.extract_strided_slice %0 {offsets = [0, 0], sizes = [1, 256], strides = [1, 1]} : vector<6x256xf32> to vector<1x256xf32>
    %c3_35 = arith.constant 3 : index
    %c0_36 = arith.constant 0 : index
    %101 = memref.load %arg2[%c3_35, %c0_36] : memref<6x6xf32, #tpu.memory_space<smem>>
    %102 = vector.broadcast %101 : f32 to vector<1x256xf32>
    %103 = arith.mulf %100, %102 : vector<1x256xf32>
    %104 = vector.extract_strided_slice %0 {offsets = [1, 0], sizes = [1, 256], strides = [1, 1]} : vector<6x256xf32> to vector<1x256xf32>
    %c3_37 = arith.constant 3 : index
    %c1_38 = arith.constant 1 : index
    %105 = memref.load %arg2[%c3_37, %c1_38] : memref<6x6xf32, #tpu.memory_space<smem>>
    %106 = vector.broadcast %105 : f32 to vector<1x256xf32>
    %107 = arith.mulf %104, %106 : vector<1x256xf32>
    %108 = arith.addf %103, %107 : vector<1x256xf32>
    %109 = vector.extract_strided_slice %0 {offsets = [2, 0], sizes = [1, 256], strides = [1, 1]} : vector<6x256xf32> to vector<1x256xf32>
    %c3_39 = arith.constant 3 : index
    %c2_40 = arith.constant 2 : index
    %110 = memref.load %arg2[%c3_39, %c2_40] : memref<6x6xf32, #tpu.memory_space<smem>>
    %111 = vector.broadcast %110 : f32 to vector<1x256xf32>
    %112 = arith.mulf %109, %111 : vector<1x256xf32>
    %113 = arith.addf %108, %112 : vector<1x256xf32>
    %114 = vector.extract_strided_slice %0 {offsets = [3, 0], sizes = [1, 256], strides = [1, 1]} : vector<6x256xf32> to vector<1x256xf32>
    %c3_41 = arith.constant 3 : index
    %c3_42 = arith.constant 3 : index
    %115 = memref.load %arg2[%c3_41, %c3_42] : memref<6x6xf32, #tpu.memory_space<smem>>
    %116 = vector.broadcast %115 : f32 to vector<1x256xf32>
    %117 = arith.mulf %114, %116 : vector<1x256xf32>
    %118 = arith.addf %113, %117 : vector<1x256xf32>
    %119 = vector.extract_strided_slice %0 {offsets = [4, 0], sizes = [1, 256], strides = [1, 1]} : vector<6x256xf32> to vector<1x256xf32>
    %c3_43 = arith.constant 3 : index
    %c4_44 = arith.constant 4 : index
    %120 = memref.load %arg2[%c3_43, %c4_44] : memref<6x6xf32, #tpu.memory_space<smem>>
    %121 = vector.broadcast %120 : f32 to vector<1x256xf32>
    %122 = arith.mulf %119, %121 : vector<1x256xf32>
    %123 = arith.addf %118, %122 : vector<1x256xf32>
    %124 = vector.extract_strided_slice %0 {offsets = [5, 0], sizes = [1, 256], strides = [1, 1]} : vector<6x256xf32> to vector<1x256xf32>
    %c3_45 = arith.constant 3 : index
    %c5_46 = arith.constant 5 : index
    %125 = memref.load %arg2[%c3_45, %c5_46] : memref<6x6xf32, #tpu.memory_space<smem>>
    %126 = vector.broadcast %125 : f32 to vector<1x256xf32>
    %127 = arith.mulf %124, %126 : vector<1x256xf32>
    %128 = arith.addf %123, %127 : vector<1x256xf32>
    %c3_47 = arith.constant 3 : index
    %129 = memref.load %arg3[%c3_47] : memref<6xf32, #tpu.memory_space<smem>>
    %130 = vector.broadcast %129 : f32 to vector<1x256xf32>
    %131 = arith.addf %128, %130 : vector<1x256xf32>
    %132 = math.tanh %131 : vector<1x256xf32>
    %133 = vector.extract_strided_slice %0 {offsets = [0, 0], sizes = [1, 256], strides = [1, 1]} : vector<6x256xf32> to vector<1x256xf32>
    %c4_48 = arith.constant 4 : index
    %c0_49 = arith.constant 0 : index
    %134 = memref.load %arg2[%c4_48, %c0_49] : memref<6x6xf32, #tpu.memory_space<smem>>
    %135 = vector.broadcast %134 : f32 to vector<1x256xf32>
    %136 = arith.mulf %133, %135 : vector<1x256xf32>
    %137 = vector.extract_strided_slice %0 {offsets = [1, 0], sizes = [1, 256], strides = [1, 1]} : vector<6x256xf32> to vector<1x256xf32>
    %c4_50 = arith.constant 4 : index
    %c1_51 = arith.constant 1 : index
    %138 = memref.load %arg2[%c4_50, %c1_51] : memref<6x6xf32, #tpu.memory_space<smem>>
    %139 = vector.broadcast %138 : f32 to vector<1x256xf32>
    %140 = arith.mulf %137, %139 : vector<1x256xf32>
    %141 = arith.addf %136, %140 : vector<1x256xf32>
    %142 = vector.extract_strided_slice %0 {offsets = [2, 0], sizes = [1, 256], strides = [1, 1]} : vector<6x256xf32> to vector<1x256xf32>
    %c4_52 = arith.constant 4 : index
    %c2_53 = arith.constant 2 : index
    %143 = memref.load %arg2[%c4_52, %c2_53] : memref<6x6xf32, #tpu.memory_space<smem>>
    %144 = vector.broadcast %143 : f32 to vector<1x256xf32>
    %145 = arith.mulf %142, %144 : vector<1x256xf32>
    %146 = arith.addf %141, %145 : vector<1x256xf32>
    %147 = vector.extract_strided_slice %0 {offsets = [3, 0], sizes = [1, 256], strides = [1, 1]} : vector<6x256xf32> to vector<1x256xf32>
    %c4_54 = arith.constant 4 : index
    %c3_55 = arith.constant 3 : index
    %148 = memref.load %arg2[%c4_54, %c3_55] : memref<6x6xf32, #tpu.memory_space<smem>>
    %149 = vector.broadcast %148 : f32 to vector<1x256xf32>
    %150 = arith.mulf %147, %149 : vector<1x256xf32>
    %151 = arith.addf %146, %150 : vector<1x256xf32>
    %152 = vector.extract_strided_slice %0 {offsets = [4, 0], sizes = [1, 256], strides = [1, 1]} : vector<6x256xf32> to vector<1x256xf32>
    %c4_56 = arith.constant 4 : index
    %c4_57 = arith.constant 4 : index
    %153 = memref.load %arg2[%c4_56, %c4_57] : memref<6x6xf32, #tpu.memory_space<smem>>
    %154 = vector.broadcast %153 : f32 to vector<1x256xf32>
    %155 = arith.mulf %152, %154 : vector<1x256xf32>
    %156 = arith.addf %151, %155 : vector<1x256xf32>
    %157 = vector.extract_strided_slice %0 {offsets = [5, 0], sizes = [1, 256], strides = [1, 1]} : vector<6x256xf32> to vector<1x256xf32>
    %c4_58 = arith.constant 4 : index
    %c5_59 = arith.constant 5 : index
    %158 = memref.load %arg2[%c4_58, %c5_59] : memref<6x6xf32, #tpu.memory_space<smem>>
    %159 = vector.broadcast %158 : f32 to vector<1x256xf32>
    %160 = arith.mulf %157, %159 : vector<1x256xf32>
    %161 = arith.addf %156, %160 : vector<1x256xf32>
    %c4_60 = arith.constant 4 : index
    %162 = memref.load %arg3[%c4_60] : memref<6xf32, #tpu.memory_space<smem>>
    %163 = vector.broadcast %162 : f32 to vector<1x256xf32>
    %164 = arith.addf %161, %163 : vector<1x256xf32>
    %165 = math.tanh %164 : vector<1x256xf32>
    %166 = vector.extract_strided_slice %0 {offsets = [0, 0], sizes = [1, 256], strides = [1, 1]} : vector<6x256xf32> to vector<1x256xf32>
    %c5_61 = arith.constant 5 : index
    %c0_62 = arith.constant 0 : index
    %167 = memref.load %arg2[%c5_61, %c0_62] : memref<6x6xf32, #tpu.memory_space<smem>>
    %168 = vector.broadcast %167 : f32 to vector<1x256xf32>
    %169 = arith.mulf %166, %168 : vector<1x256xf32>
    %170 = vector.extract_strided_slice %0 {offsets = [1, 0], sizes = [1, 256], strides = [1, 1]} : vector<6x256xf32> to vector<1x256xf32>
    %c5_63 = arith.constant 5 : index
    %c1_64 = arith.constant 1 : index
    %171 = memref.load %arg2[%c5_63, %c1_64] : memref<6x6xf32, #tpu.memory_space<smem>>
    %172 = vector.broadcast %171 : f32 to vector<1x256xf32>
    %173 = arith.mulf %170, %172 : vector<1x256xf32>
    %174 = arith.addf %169, %173 : vector<1x256xf32>
    %175 = vector.extract_strided_slice %0 {offsets = [2, 0], sizes = [1, 256], strides = [1, 1]} : vector<6x256xf32> to vector<1x256xf32>
    %c5_65 = arith.constant 5 : index
    %c2_66 = arith.constant 2 : index
    %176 = memref.load %arg2[%c5_65, %c2_66] : memref<6x6xf32, #tpu.memory_space<smem>>
    %177 = vector.broadcast %176 : f32 to vector<1x256xf32>
    %178 = arith.mulf %175, %177 : vector<1x256xf32>
    %179 = arith.addf %174, %178 : vector<1x256xf32>
    %180 = vector.extract_strided_slice %0 {offsets = [3, 0], sizes = [1, 256], strides = [1, 1]} : vector<6x256xf32> to vector<1x256xf32>
    %c5_67 = arith.constant 5 : index
    %c3_68 = arith.constant 3 : index
    %181 = memref.load %arg2[%c5_67, %c3_68] : memref<6x6xf32, #tpu.memory_space<smem>>
    %182 = vector.broadcast %181 : f32 to vector<1x256xf32>
    %183 = arith.mulf %180, %182 : vector<1x256xf32>
    %184 = arith.addf %179, %183 : vector<1x256xf32>
    %185 = vector.extract_strided_slice %0 {offsets = [4, 0], sizes = [1, 256], strides = [1, 1]} : vector<6x256xf32> to vector<1x256xf32>
    %c5_69 = arith.constant 5 : index
    %c4_70 = arith.constant 4 : index
    %186 = memref.load %arg2[%c5_69, %c4_70] : memref<6x6xf32, #tpu.memory_space<smem>>
    %187 = vector.broadcast %186 : f32 to vector<1x256xf32>
    %188 = arith.mulf %185, %187 : vector<1x256xf32>
    %189 = arith.addf %184, %188 : vector<1x256xf32>
    %190 = vector.extract_strided_slice %0 {offsets = [5, 0], sizes = [1, 256], strides = [1, 1]} : vector<6x256xf32> to vector<1x256xf32>
    %c5_71 = arith.constant 5 : index
    %c5_72 = arith.constant 5 : index
    %191 = memref.load %arg2[%c5_71, %c5_72] : memref<6x6xf32, #tpu.memory_space<smem>>
    %192 = vector.broadcast %191 : f32 to vector<1x256xf32>
    %193 = arith.mulf %190, %192 : vector<1x256xf32>
    %194 = arith.addf %189, %193 : vector<1x256xf32>
    %c5_73 = arith.constant 5 : index
    %195 = memref.load %arg3[%c5_73] : memref<6xf32, #tpu.memory_space<smem>>
    %196 = vector.broadcast %195 : f32 to vector<1x256xf32>
    %197 = arith.addf %194, %196 : vector<1x256xf32>
    %198 = math.tanh %197 : vector<1x256xf32>
    %c0_74 = arith.constant 0 : index
    %c0_75 = arith.constant 0 : index
    %199 = memref.load %arg4[%c0_74, %c0_75] : memref<5x6xf32, #tpu.memory_space<smem>>
    %200 = vector.broadcast %199 : f32 to vector<1x256xf32>
    %201 = arith.mulf %33, %200 : vector<1x256xf32>
    %c0_76 = arith.constant 0 : index
    %c1_77 = arith.constant 1 : index
    %202 = memref.load %arg4[%c0_76, %c1_77] : memref<5x6xf32, #tpu.memory_space<smem>>
    %203 = vector.broadcast %202 : f32 to vector<1x256xf32>
    %204 = arith.mulf %66, %203 : vector<1x256xf32>
    %205 = arith.addf %201, %204 : vector<1x256xf32>
    %c0_78 = arith.constant 0 : index
    %c2_79 = arith.constant 2 : index
    %206 = memref.load %arg4[%c0_78, %c2_79] : memref<5x6xf32, #tpu.memory_space<smem>>
    %207 = vector.broadcast %206 : f32 to vector<1x256xf32>
    %208 = arith.mulf %99, %207 : vector<1x256xf32>
    %209 = arith.addf %205, %208 : vector<1x256xf32>
    %c0_80 = arith.constant 0 : index
    %c3_81 = arith.constant 3 : index
    %210 = memref.load %arg4[%c0_80, %c3_81] : memref<5x6xf32, #tpu.memory_space<smem>>
    %211 = vector.broadcast %210 : f32 to vector<1x256xf32>
    %212 = arith.mulf %132, %211 : vector<1x256xf32>
    %213 = arith.addf %209, %212 : vector<1x256xf32>
    %c0_82 = arith.constant 0 : index
    %c4_83 = arith.constant 4 : index
    %214 = memref.load %arg4[%c0_82, %c4_83] : memref<5x6xf32, #tpu.memory_space<smem>>
    %215 = vector.broadcast %214 : f32 to vector<1x256xf32>
    %216 = arith.mulf %165, %215 : vector<1x256xf32>
    %217 = arith.addf %213, %216 : vector<1x256xf32>
    %c0_84 = arith.constant 0 : index
    %c5_85 = arith.constant 5 : index
    %218 = memref.load %arg4[%c0_84, %c5_85] : memref<5x6xf32, #tpu.memory_space<smem>>
    %219 = vector.broadcast %218 : f32 to vector<1x256xf32>
    %220 = arith.mulf %198, %219 : vector<1x256xf32>
    %221 = arith.addf %217, %220 : vector<1x256xf32>
    %c0_86 = arith.constant 0 : index
    %222 = memref.load %arg5[%c0_86] : memref<5xf32, #tpu.memory_space<smem>>
    %223 = vector.broadcast %222 : f32 to vector<1x256xf32>
    %224 = arith.addf %221, %223 : vector<1x256xf32>
    %225 = arith.negf %224 : vector<1x256xf32>
    %226 = math.exp %225 : vector<1x256xf32>
    %cst = arith.constant 1.000000e+00 : f32
    %227 = vector.broadcast %cst : f32 to vector<1x256xf32>
    %228 = arith.addf %227, %226 : vector<1x256xf32>
    %229 = arith.divf %227, %228 : vector<1x256xf32>
    %c1_87 = arith.constant 1 : index
    %c0_88 = arith.constant 0 : index
    %230 = memref.load %arg4[%c1_87, %c0_88] : memref<5x6xf32, #tpu.memory_space<smem>>
    %231 = vector.broadcast %230 : f32 to vector<1x256xf32>
    %232 = arith.mulf %33, %231 : vector<1x256xf32>
    %c1_89 = arith.constant 1 : index
    %c1_90 = arith.constant 1 : index
    %233 = memref.load %arg4[%c1_89, %c1_90] : memref<5x6xf32, #tpu.memory_space<smem>>
    %234 = vector.broadcast %233 : f32 to vector<1x256xf32>
    %235 = arith.mulf %66, %234 : vector<1x256xf32>
    %236 = arith.addf %232, %235 : vector<1x256xf32>
    %c1_91 = arith.constant 1 : index
    %c2_92 = arith.constant 2 : index
    %237 = memref.load %arg4[%c1_91, %c2_92] : memref<5x6xf32, #tpu.memory_space<smem>>
    %238 = vector.broadcast %237 : f32 to vector<1x256xf32>
    %239 = arith.mulf %99, %238 : vector<1x256xf32>
    %240 = arith.addf %236, %239 : vector<1x256xf32>
    %c1_93 = arith.constant 1 : index
    %c3_94 = arith.constant 3 : index
    %241 = memref.load %arg4[%c1_93, %c3_94] : memref<5x6xf32, #tpu.memory_space<smem>>
    %242 = vector.broadcast %241 : f32 to vector<1x256xf32>
    %243 = arith.mulf %132, %242 : vector<1x256xf32>
    %244 = arith.addf %240, %243 : vector<1x256xf32>
    %c1_95 = arith.constant 1 : index
    %c4_96 = arith.constant 4 : index
    %245 = memref.load %arg4[%c1_95, %c4_96] : memref<5x6xf32, #tpu.memory_space<smem>>
    %246 = vector.broadcast %245 : f32 to vector<1x256xf32>
    %247 = arith.mulf %165, %246 : vector<1x256xf32>
    %248 = arith.addf %244, %247 : vector<1x256xf32>
    %c1_97 = arith.constant 1 : index
    %c5_98 = arith.constant 5 : index
    %249 = memref.load %arg4[%c1_97, %c5_98] : memref<5x6xf32, #tpu.memory_space<smem>>
    %250 = vector.broadcast %249 : f32 to vector<1x256xf32>
    %251 = arith.mulf %198, %250 : vector<1x256xf32>
    %252 = arith.addf %248, %251 : vector<1x256xf32>
    %c1_99 = arith.constant 1 : index
    %253 = memref.load %arg5[%c1_99] : memref<5xf32, #tpu.memory_space<smem>>
    %254 = vector.broadcast %253 : f32 to vector<1x256xf32>
    %255 = arith.addf %252, %254 : vector<1x256xf32>
    %256 = arith.negf %255 : vector<1x256xf32>
    %257 = math.exp %256 : vector<1x256xf32>
    %cst_100 = arith.constant 1.000000e+00 : f32
    %258 = vector.broadcast %cst_100 : f32 to vector<1x256xf32>
    %259 = arith.addf %258, %257 : vector<1x256xf32>
    %260 = arith.divf %258, %259 : vector<1x256xf32>
    %c2_101 = arith.constant 2 : index
    %c0_102 = arith.constant 0 : index
    %261 = memref.load %arg4[%c2_101, %c0_102] : memref<5x6xf32, #tpu.memory_space<smem>>
    %262 = vector.broadcast %261 : f32 to vector<1x256xf32>
    %263 = arith.mulf %33, %262 : vector<1x256xf32>
    %c2_103 = arith.constant 2 : index
    %c1_104 = arith.constant 1 : index
    %264 = memref.load %arg4[%c2_103, %c1_104] : memref<5x6xf32, #tpu.memory_space<smem>>
    %265 = vector.broadcast %264 : f32 to vector<1x256xf32>
    %266 = arith.mulf %66, %265 : vector<1x256xf32>
    %267 = arith.addf %263, %266 : vector<1x256xf32>
    %c2_105 = arith.constant 2 : index
    %c2_106 = arith.constant 2 : index
    %268 = memref.load %arg4[%c2_105, %c2_106] : memref<5x6xf32, #tpu.memory_space<smem>>
    %269 = vector.broadcast %268 : f32 to vector<1x256xf32>
    %270 = arith.mulf %99, %269 : vector<1x256xf32>
    %271 = arith.addf %267, %270 : vector<1x256xf32>
    %c2_107 = arith.constant 2 : index
    %c3_108 = arith.constant 3 : index
    %272 = memref.load %arg4[%c2_107, %c3_108] : memref<5x6xf32, #tpu.memory_space<smem>>
    %273 = vector.broadcast %272 : f32 to vector<1x256xf32>
    %274 = arith.mulf %132, %273 : vector<1x256xf32>
    %275 = arith.addf %271, %274 : vector<1x256xf32>
    %c2_109 = arith.constant 2 : index
    %c4_110 = arith.constant 4 : index
    %276 = memref.load %arg4[%c2_109, %c4_110] : memref<5x6xf32, #tpu.memory_space<smem>>
    %277 = vector.broadcast %276 : f32 to vector<1x256xf32>
    %278 = arith.mulf %165, %277 : vector<1x256xf32>
    %279 = arith.addf %275, %278 : vector<1x256xf32>
    %c2_111 = arith.constant 2 : index
    %c5_112 = arith.constant 5 : index
    %280 = memref.load %arg4[%c2_111, %c5_112] : memref<5x6xf32, #tpu.memory_space<smem>>
    %281 = vector.broadcast %280 : f32 to vector<1x256xf32>
    %282 = arith.mulf %198, %281 : vector<1x256xf32>
    %283 = arith.addf %279, %282 : vector<1x256xf32>
    %c2_113 = arith.constant 2 : index
    %284 = memref.load %arg5[%c2_113] : memref<5xf32, #tpu.memory_space<smem>>
    %285 = vector.broadcast %284 : f32 to vector<1x256xf32>
    %286 = arith.addf %283, %285 : vector<1x256xf32>
    %287 = arith.negf %286 : vector<1x256xf32>
    %288 = math.exp %287 : vector<1x256xf32>
    %cst_114 = arith.constant 1.000000e+00 : f32
    %289 = vector.broadcast %cst_114 : f32 to vector<1x256xf32>
    %290 = arith.addf %289, %288 : vector<1x256xf32>
    %291 = arith.divf %289, %290 : vector<1x256xf32>
    %c3_115 = arith.constant 3 : index
    %c0_116 = arith.constant 0 : index
    %292 = memref.load %arg4[%c3_115, %c0_116] : memref<5x6xf32, #tpu.memory_space<smem>>
    %293 = vector.broadcast %292 : f32 to vector<1x256xf32>
    %294 = arith.mulf %33, %293 : vector<1x256xf32>
    %c3_117 = arith.constant 3 : index
    %c1_118 = arith.constant 1 : index
    %295 = memref.load %arg4[%c3_117, %c1_118] : memref<5x6xf32, #tpu.memory_space<smem>>
    %296 = vector.broadcast %295 : f32 to vector<1x256xf32>
    %297 = arith.mulf %66, %296 : vector<1x256xf32>
    %298 = arith.addf %294, %297 : vector<1x256xf32>
    %c3_119 = arith.constant 3 : index
    %c2_120 = arith.constant 2 : index
    %299 = memref.load %arg4[%c3_119, %c2_120] : memref<5x6xf32, #tpu.memory_space<smem>>
    %300 = vector.broadcast %299 : f32 to vector<1x256xf32>
    %301 = arith.mulf %99, %300 : vector<1x256xf32>
    %302 = arith.addf %298, %301 : vector<1x256xf32>
    %c3_121 = arith.constant 3 : index
    %c3_122 = arith.constant 3 : index
    %303 = memref.load %arg4[%c3_121, %c3_122] : memref<5x6xf32, #tpu.memory_space<smem>>
    %304 = vector.broadcast %303 : f32 to vector<1x256xf32>
    %305 = arith.mulf %132, %304 : vector<1x256xf32>
    %306 = arith.addf %302, %305 : vector<1x256xf32>
    %c3_123 = arith.constant 3 : index
    %c4_124 = arith.constant 4 : index
    %307 = memref.load %arg4[%c3_123, %c4_124] : memref<5x6xf32, #tpu.memory_space<smem>>
    %308 = vector.broadcast %307 : f32 to vector<1x256xf32>
    %309 = arith.mulf %165, %308 : vector<1x256xf32>
    %310 = arith.addf %306, %309 : vector<1x256xf32>
    %c3_125 = arith.constant 3 : index
    %c5_126 = arith.constant 5 : index
    %311 = memref.load %arg4[%c3_125, %c5_126] : memref<5x6xf32, #tpu.memory_space<smem>>
    %312 = vector.broadcast %311 : f32 to vector<1x256xf32>
    %313 = arith.mulf %198, %312 : vector<1x256xf32>
    %314 = arith.addf %310, %313 : vector<1x256xf32>
    %c3_127 = arith.constant 3 : index
    %315 = memref.load %arg5[%c3_127] : memref<5xf32, #tpu.memory_space<smem>>
    %316 = vector.broadcast %315 : f32 to vector<1x256xf32>
    %317 = arith.addf %314, %316 : vector<1x256xf32>
    %318 = arith.negf %317 : vector<1x256xf32>
    %319 = math.exp %318 : vector<1x256xf32>
    %cst_128 = arith.constant 1.000000e+00 : f32
    %320 = vector.broadcast %cst_128 : f32 to vector<1x256xf32>
    %321 = arith.addf %320, %319 : vector<1x256xf32>
    %322 = arith.divf %320, %321 : vector<1x256xf32>
    %c4_129 = arith.constant 4 : index
    %c0_130 = arith.constant 0 : index
    %323 = memref.load %arg4[%c4_129, %c0_130] : memref<5x6xf32, #tpu.memory_space<smem>>
    %324 = vector.broadcast %323 : f32 to vector<1x256xf32>
    %325 = arith.mulf %33, %324 : vector<1x256xf32>
    %c4_131 = arith.constant 4 : index
    %c1_132 = arith.constant 1 : index
    %326 = memref.load %arg4[%c4_131, %c1_132] : memref<5x6xf32, #tpu.memory_space<smem>>
    %327 = vector.broadcast %326 : f32 to vector<1x256xf32>
    %328 = arith.mulf %66, %327 : vector<1x256xf32>
    %329 = arith.addf %325, %328 : vector<1x256xf32>
    %c4_133 = arith.constant 4 : index
    %c2_134 = arith.constant 2 : index
    %330 = memref.load %arg4[%c4_133, %c2_134] : memref<5x6xf32, #tpu.memory_space<smem>>
    %331 = vector.broadcast %330 : f32 to vector<1x256xf32>
    %332 = arith.mulf %99, %331 : vector<1x256xf32>
    %333 = arith.addf %329, %332 : vector<1x256xf32>
    %c4_135 = arith.constant 4 : index
    %c3_136 = arith.constant 3 : index
    %334 = memref.load %arg4[%c4_135, %c3_136] : memref<5x6xf32, #tpu.memory_space<smem>>
    %335 = vector.broadcast %334 : f32 to vector<1x256xf32>
    %336 = arith.mulf %132, %335 : vector<1x256xf32>
    %337 = arith.addf %333, %336 : vector<1x256xf32>
    %c4_137 = arith.constant 4 : index
    %c4_138 = arith.constant 4 : index
    %338 = memref.load %arg4[%c4_137, %c4_138] : memref<5x6xf32, #tpu.memory_space<smem>>
    %339 = vector.broadcast %338 : f32 to vector<1x256xf32>
    %340 = arith.mulf %165, %339 : vector<1x256xf32>
    %341 = arith.addf %337, %340 : vector<1x256xf32>
    %c4_139 = arith.constant 4 : index
    %c5_140 = arith.constant 5 : index
    %342 = memref.load %arg4[%c4_139, %c5_140] : memref<5x6xf32, #tpu.memory_space<smem>>
    %343 = vector.broadcast %342 : f32 to vector<1x256xf32>
    %344 = arith.mulf %198, %343 : vector<1x256xf32>
    %345 = arith.addf %341, %344 : vector<1x256xf32>
    %c4_141 = arith.constant 4 : index
    %346 = memref.load %arg5[%c4_141] : memref<5xf32, #tpu.memory_space<smem>>
    %347 = vector.broadcast %346 : f32 to vector<1x256xf32>
    %348 = arith.addf %345, %347 : vector<1x256xf32>
    %349 = arith.negf %348 : vector<1x256xf32>
    %350 = math.exp %349 : vector<1x256xf32>
    %cst_142 = arith.constant 1.000000e+00 : f32
    %351 = vector.broadcast %cst_142 : f32 to vector<1x256xf32>
    %352 = arith.addf %351, %350 : vector<1x256xf32>
    %353 = arith.divf %351, %352 : vector<1x256xf32>
    %354 = tpu.concatenate %229, %260, %291, %322, %353 in 0 : vector<1x256xf32>, vector<1x256xf32>, vector<1x256xf32>, vector<1x256xf32>, vector<1x256xf32> -> vector<5x256xf32>
    %c0_143 = arith.constant 0 : index
    %c0_144 = arith.constant 0 : index
    %355 = vector.load %arg6[%c0_143, %c0_144] : memref<5x256xf32, #tpu.memory_space<vmem>>, vector<5x256xf32>
    tpu.vector_store %arg6[%c0_143, %c0_144], %354 {strides = array<i32>} : memref<5x256xf32, #tpu.memory_space<vmem>>, vector<5x256xf32>,
    return
  }
  func.func @transform_0(%arg0: i32) -> (i32, i32) {
    %c0_i32 = arith.constant 0 : i32
    %c0_i32_0 = arith.constant 0 : i32
    return %c0_i32, %arg0 : i32, i32
  }
  func.func @transform_1(%arg0: i32) -> (i32, i32) {
    %c0_i32 = arith.constant 0 : i32
    %c0_i32_0 = arith.constant 0 : i32
    %c0_i32_1 = arith.constant 0 : i32
    return %c0_i32, %c0_i32_0 : i32, i32
  }
  func.func @transform_2(%arg0: i32) -> i32 {
    %c0_i32 = arith.constant 0 : i32
    %c0_i32_0 = arith.constant 0 : i32
    return %c0_i32 : i32
  }
  func.func @transform_3(%arg0: i32) -> (i32, i32) {
    %c0_i32 = arith.constant 0 : i32
    %c0_i32_0 = arith.constant 0 : i32
    %c0_i32_1 = arith.constant 0 : i32
    return %c0_i32, %c0_i32_0 : i32, i32
  }
  func.func @transform_4(%arg0: i32) -> i32 {
    %c0_i32 = arith.constant 0 : i32
    %c0_i32_0 = arith.constant 0 : i32
    return %c0_i32 : i32
  }
  func.func @transform_5(%arg0: i32) -> (i32, i32) {
    %c0_i32 = arith.constant 0 : i32
    %c0_i32_0 = arith.constant 0 : i32
    return %c0_i32, %arg0 : i32, i32
  }
}

</mosaic_0001>

<llo_original>
// kernel: tpu_custom_call.1
$region0: #{tpu_custom_call.1}
  #allocation0 [shape = 'u32[]', space=smem, size = 0x4, offset = 0x4, fixed_abs, tag = 'smem constant byte address 0x4 - core index']
  #allocation1 [shape = 'u32[144,128]{1,0:T(1,128)}', space=vmem, size = 0x12000, scoped, tag = 'internal scratch']
  %s0 = inlined_call_operand.hbm [shape: f32[6,768], index: 0, kind: input, shape index: {}]
  %s1 = inlined_call_operand.hbm [shape: f32[6,6], index: 1, kind: input, shape index: {}]
  %s2 = inlined_call_operand.vmem [shape: f32[6], index: 2, kind: input, shape index: {}]
  %s3 = inlined_call_operand.vmem [shape: f32[5,6], index: 3, kind: input, shape index: {}]
  %s4 = inlined_call_operand.vmem [shape: f32[5], index: 4, kind: input, shape index: {}]
  %s5 = inlined_call_operand.hbm [shape: f32[5,768], index: 5, kind: output, shape index: {}]
  %s6 = sld [smem:[#allocation0]]
  $region73: #{tpu_custom_call.1} parent=0
    _
  %s8 = ssub.s32 1, %s6
  %s9 = scalar_select 0, %s8, %s6
  $region1: #{tpu_custom_call.1} parent=0
    #allocation2 [shape = 'u8[16384]{0}', space=vmem, size = 0x4000, scoped, tag = 'input window, operand 0']
    #allocation3 [shape = 's32[2]{0}', space=sflag, size = 0x8, scoped, tag = 'scoped memory for tpu_custom_call.1']
    #allocation4 [shape = 's32[2]{0}', space=sflag, size = 0x8, scoped, tag = 'scoped memory for tpu_custom_call.1']
    #allocation5 [shape = 's32[2]{0}', space=sflag, size = 0x8, scoped, tag = 'scoped memory for tpu_custom_call.1']
    #allocation6 [shape = 's32[2]{0}', space=sflag, size = 0x8, scoped, tag = 'scoped memory for tpu_custom_call.1']
    #allocation7 [shape = 'u8[4096]{0}', space=smem, size = 0x1000, scoped, tag = 'input window, operand 1, single buffered']
    #allocation8 [shape = 'u8[512]{0}', space=smem, size = 0x200, scoped, tag = 'input window, operand 2, single buffered']
    #allocation9 [shape = 'u8[4096]{0}', space=smem, size = 0x1000, scoped, tag = 'input window, operand 3, single buffered']
    #allocation10 [shape = 's32[1]{0}', space=sflag, size = 0x4, scoped, tag = 'scoped memory for tpu_custom_call.1']
    #allocation11 [shape = 'u8[512]{0}', space=smem, size = 0x200, scoped, tag = 'input window, operand 4, single buffered']
    #allocation12 [shape = 'u8[16384]{0}', space=vmem, size = 0x4000, scoped, tag = 'output window, operand 0']
    %10 = vsyncpa [#allocation3], 0
    %s11 = scalar_lea.sflag [#allocation3], 1
    %12 = vsyncpa %s11, 0
    %13 = vsyncpa [#allocation5], 0
    %14 = vsyncpa [#allocation6], 0
    %15 = vsyncpa [#allocation10], 0
    %16 = vsyncpa [#allocation4], 0
    %s17 = scalar_lea.sflag [#allocation4], 1
    %18 = vsyncpa %s17, 0
    loop: start=0, step=1, limit=5
    $region2: #{tpu_custom_call.1} parent=1 // loop_pre_header
      _
    $region3: #{tpu_custom_call.1} parent=1 // loop_header
      %s20 = sphi 0, %s24
      %p21 = scmp.ge.s32.totalorder %s20, 5
      %s30 = sphi 0, %s32
      %s33 = sphi 0, %s30
      %s34 = sphi 0, %s33
      %s50 = sphi 0, %s34
      %s54 = sphi 0, %s54
      %s56 = sphi 0, %s54
      %s57 = sphi 0, %s56
      %s71 = sphi 0, %s57
      %s75 = sphi 0, %s75
      %s77 = sphi 0, %s75
      %s78 = sphi 0, %s77
      %s92 = sphi 0, %s78
      %s96 = sphi 0, %s96
      %s98 = sphi 0, %s96
      %s99 = sphi 0, %s98
      %s113 = sphi 0, %s99
      %s117 = sphi 0, %s117
      %s119 = sphi 0, %s117
      %s120 = sphi 0, %s119
      %s134 = sphi 0, %s120
      %s140 = sphi 0, %s142
      %s143 = sphi 0, %s140
      %s144 = sphi 0, %s143
      %s160 = sphi 0, %s144
    $region4: #{tpu_custom_call.1} parent=1 // loop_header_branch
      %23 = sbr.rel (%p21) target = $region8
    $region5: #{tpu_custom_call.1} parent=1 // loop_body
      %s25 = ssub.s32 %s20, 1
      %s26 = ssub.s32 %s20, 2
      %s27 = sadd.s32 %s20, 1
      %s28 = ssub.s32 %s20, %s27
      %p29 = scmp.eq.s32.totalorder %s28, 0
      %s31 = sadd.s32 %s30, 1
      %s32 = scalar_select %p29, %s30, %s31
      %p35 = pneg %p29
      %p36 = scmp.eq.s32.totalorder %s20, 2
      %p37 = por %p35, %p36
      %p38 = scmp.ne.s32.totalorder %s30, %s33
      %p39 = scmp.eq.s32.totalorder %s20, 0
      %p40 = por %p38, %p39
      %p41 = scmp.ne.s32.totalorder %s30, %s33
      %p42 = scmp.eq.s32.totalorder %s25, 2
      %p43 = por %p41, %p42
      %p44 = scmp.ne.s32.totalorder %s33, %s34
      %p45 = scmp.eq.s32.totalorder %s25, 0
      %p46 = por %p44, %p45
      %p47 = scmp.ne.s32.totalorder %s33, %s34
      %p48 = scmp.eq.s32.totalorder %s26, 2
      %p49 = por %p47, %p48
      %p51 = scmp.ne.s32.totalorder %s34, %s50
      %p52 = scmp.eq.s32.totalorder %s26, 0
      %p53 = por %p51, %p52
      %s55 = sadd.s32 %s54, 1
      %p58 = scmp.eq.s32.totalorder %s20, 2
      %p59 = scmp.ne.s32.totalorder %s54, %s56
      %p60 = scmp.eq.s32.totalorder %s20, 0
      %p61 = por %p59, %p60
      %p62 = scmp.ne.s32.totalorder %s54, %s56
      %p63 = scmp.eq.s32.totalorder %s25, 2
      %p64 = por %p62, %p63
      %p65 = scmp.ne.s32.totalorder %s56, %s57
      %p66 = scmp.eq.s32.totalorder %s25, 0
      %p67 = por %p65, %p66
      %p68 = scmp.ne.s32.totalorder %s56, %s57
      %p69 = scmp.eq.s32.totalorder %s26, 2
      %p70 = por %p68, %p69
      %p72 = scmp.ne.s32.totalorder %s57, %s71
      %p73 = scmp.eq.s32.totalorder %s26, 0
      %p74 = por %p72, %p73
      %s76 = sadd.s32 %s75, 1
      %p79 = scmp.eq.s32.totalorder %s20, 2
      %p80 = scmp.ne.s32.totalorder %s75, %s77
      %p81 = scmp.eq.s32.totalorder %s20, 0
      %p82 = por %p80, %p81
      %p83 = scmp.ne.s32.totalorder %s75, %s77
      %p84 = scmp.eq.s32.totalorder %s25, 2
      %p85 = por %p83, %p84
      %p86 = scmp.ne.s32.totalorder %s77, %s78
      %p87 = scmp.eq.s32.totalorder %s25, 0
      %p88 = por %p86, %p87
      %p89 = scmp.ne.s32.totalorder %s77, %s78
      %p90 = scmp.eq.s32.totalorder %s26, 2
      %p91 = por %p89, %p90
      %p93 = scmp.ne.s32.totalorder %s78, %s92
      %p94 = scmp.eq.s32.totalorder %s26, 0
      %p95 = por %p93, %p94
      %s97 = sadd.s32 %s96, 1
      %p100 = scmp.eq.s32.totalorder %s20, 2
      %p101 = scmp.ne.s32.totalorder %s96, %s98
      %p102 = scmp.eq.s32.totalorder %s20, 0
      %p103 = por %p101, %p102
      %p104 = scmp.ne.s32.totalorder %s96, %s98
      %p105 = scmp.eq.s32.totalorder %s25, 2
      %p106 = por %p104, %p105
      %p107 = scmp.ne.s32.totalorder %s98, %s99
      %p108 = scmp.eq.s32.totalorder %s25, 0
      %p109 = por %p107, %p108
      %p110 = scmp.ne.s32.totalorder %s98, %s99
      %p111 = scmp.eq.s32.totalorder %s26, 2
      %p112 = por %p110, %p111
      %p114 = scmp.ne.s32.totalorder %s99, %s113
      %p115 = scmp.eq.s32.totalorder %s26, 0
      %p116 = por %p114, %p115
      %s118 = sadd.s32 %s117, 1
      %p121 = scmp.eq.s32.totalorder %s20, 2
      %p122 = scmp.ne.s32.totalorder %s117, %s119
      %p123 = scmp.eq.s32.totalorder %s20, 0
      %p124 = por %p122, %p123
      %p125 = scmp.ne.s32.totalorder %s117, %s119
      %p126 = scmp.eq.s32.totalorder %s25, 2
      %p127 = por %p125, %p126
      %p128 = scmp.ne.s32.totalorder %s119, %s120
      %p129 = scmp.eq.s32.totalorder %s25, 0
      %p130 = por %p128, %p129
      %p131 = scmp.ne.s32.totalorder %s119, %s120
      %p132 = scmp.eq.s32.totalorder %s26, 2
      %p133 = por %p131, %p132
      %p135 = scmp.ne.s32.totalorder %s120, %s134
      %p136 = scmp.eq.s32.totalorder %s26, 0
      %p137 = por %p135, %p136
      %s138 = ssub.s32 %s20, %s27
      %p139 = scmp.eq.s32.totalorder %s138, 0
      %s141 = sadd.s32 %s140, 1
      %s142 = scalar_select %p139, %s140, %s141
      %p145 = pneg %p139
      %p146 = scmp.eq.s32.totalorder %s20, 2
      %p147 = por %p145, %p146
      %p148 = scmp.ne.s32.totalorder %s140, %s143
      %p149 = scmp.eq.s32.totalorder %s20, 0
      %p150 = por %p148, %p149
      %p151 = scmp.ne.s32.totalorder %s140, %s143
      %p152 = scmp.eq.s32.totalorder %s25, 2
      %p153 = por %p151, %p152
      %p154 = scmp.ne.s32.totalorder %s143, %s144
      %p155 = scmp.eq.s32.totalorder %s25, 0
      %p156 = por %p154, %p155
      %p157 = scmp.ne.s32.totalorder %s143, %s144
      %p158 = scmp.eq.s32.totalorder %s26, 2
      %p159 = por %p157, %p158
      %p161 = scmp.ne.s32.totalorder %s144, %s160
      %p162 = scmp.eq.s32.totalorder %s26, 0
      %p163 = por %p161, %p162
      %p164 = scmp.le.s32.totalorder 1, %s20
      %p165 = scmp.lt.s32.totalorder %s20, 4
      %p166 = pnand %p164, %p165
      %p167 = pneg %p166
      // Predicated region
      $region9: #{tpu_custom_call.1} parent=5 // pred_check
        _
      $region10: #{tpu_custom_call.1} parent=5 // pred_check_branch
        %169 = sbr.rel (%p166) target = $region12
      $region11: #{tpu_custom_call.1} parent=5 // pred_region
        %s170 = ssub.s32 %s20, 1
        // Predicated region
        $region13: #{tpu_custom_call.1} parent=11 // pred_check
          %p171 = pneg %p67
        $region14: #{tpu_custom_call.1} parent=11 // pred_check_branch
          %173 = sbr.rel (%p171) target = $region16
        $region15: #{tpu_custom_call.1} parent=11 // pred_region
          %s175 = ssub.s32 128, 128
          %176 = vsyncadd [#allocation5], %s175
          %179 = dma.hbm_to_smem %s1, 128, [#allocation7], [#allocation5]
        $region16: #{tpu_custom_call.1} parent=11 // pred_fallthru
          _
        // Predicated region
        $region17: #{tpu_custom_call.1} parent=11 // pred_check
          %p180 = pneg %p88
        $region18: #{tpu_custom_call.1} parent=11 // pred_check_branch
          %182 = sbr.rel (%p180) target = $region20
        $region19: #{tpu_custom_call.1} parent=11 // pred_region
          %s184 = ssub.s32 16, 16
          %185 = vsyncadd [#allocation6], %s184
          %s187 = sshll.u32 %s2, 4
          %s188 = int_to_ptr.vmem [resolvable:$true] %s187
          %190 = dma.vmem_to_smem %s188, 16, [#allocation8], [#allocation6]
        $region20: #{tpu_custom_call.1} parent=11 // pred_fallthru
          _
        // Predicated region
        $region21: #{tpu_custom_call.1} parent=11 // pred_check
          %p191 = pneg %p109
        $region22: #{tpu_custom_call.1} parent=11 // pred_check_branch
          %193 = sbr.rel (%p191) target = $region24
        $region23: #{tpu_custom_call.1} parent=11 // pred_region
          %s195 = ssub.s32 128, 128
          %196 = vsyncadd [#allocation10], %s195
          %s198 = sshll.u32 %s3, 4
          %s199 = int_to_ptr.vmem [resolvable:$true] %s198
          %201 = dma.vmem_to_smem %s199, 128, [#allocation9], [#allocation10]
        $region24: #{tpu_custom_call.1} parent=11 // pred_fallthru
          _
        // Predicated region
        $region25: #{tpu_custom_call.1} parent=11 // pred_check
          %p202 = pneg %p130
        $region26: #{tpu_custom_call.1} parent=11 // pred_check_branch
          %204 = sbr.rel (%p202) target = $region28
        $region27: #{tpu_custom_call.1} parent=11 // pred_region
          %s206 = ssub.s32 16, 16
          %207 = vsyncadd [#allocation10], %s206
          %s209 = sshll.u32 %s4, 4
          %s210 = int_to_ptr.vmem [resolvable:$true] %s209
          %212 = dma.vmem_to_smem %s210, 16, [#allocation11], [#allocation10]
        $region28: #{tpu_custom_call.1} parent=11 // pred_fallthru
          _
      $region12: #{tpu_custom_call.1} parent=5 // pred_fallthru
        _
      %p213 = scmp.lt.s32.totalorder %s20, 3
      // Predicated region
      $region29: #{tpu_custom_call.1} parent=5 // pred_check
        %p214 = pneg %p213
      $region30: #{tpu_custom_call.1} parent=5 // pred_check_branch
        %216 = sbr.rel (%p214) target = $region32
      $region31: #{tpu_custom_call.1} parent=5 // pred_region
        // Predicated region
        $region33: #{tpu_custom_call.1} parent=31 // pred_check
          %p217 = pneg %p40
        $region34: #{tpu_custom_call.1} parent=31 // pred_check_branch
          %219 = sbr.rel (%p217) target = $region36
        $region35: #{tpu_custom_call.1} parent=31 // pred_region
          %s220 = sand.u32 %s30, 1
          %s221 = scalar_lea.sflag [#allocation3], %s220
          %s222 = sand.u32 %s30, 1
          %s223 = smul.addr %s222, 16
          %s224 = scalar_lea.vmem [#allocation2], %s223
          %s225 = smul.u32 2, %s20
          %s227 = ssub.s32 256, 256
          %228 = vsyncadd %s221, %s227
          %s229 = smul.addr %s225, 128
          %s230 = scalar_lea.hbm %s0, %s229
          %s232 = sshll.u32 %s224, 4
          %s233 = int_to_ptr.vmem [resolvable:$true] %s232
          %235 = dma.hbm_to_vmem [thread:$0]  %s230, 256, %s233, %s221
        $region36: #{tpu_custom_call.1} parent=31 // pred_fallthru
          _
      $region32: #{tpu_custom_call.1} parent=5 // pred_fallthru
        _
      %p236 = scmp.le.s32.totalorder 1, %s20
      %p237 = scmp.lt.s32.totalorder %s20, 4
      %p238 = pnand %p236, %p237
      %p239 = pneg %p238
      // Predicated region
      $region37: #{tpu_custom_call.1} parent=5 // pred_check
        _
      $region38: #{tpu_custom_call.1} parent=5 // pred_check_branch
        %241 = sbr.rel (%p238) target = $region40
      $region39: #{tpu_custom_call.1} parent=5 // pred_region
        %s242 = ssub.s32 %s20, 1
        %s243 = sand.u32 %s33, 1
        %s244 = scalar_lea.sflag [#allocation3], %s243
        %s245 = sand.u32 %s33, 1
        %s246 = smul.addr %s245, 16
        %s247 = scalar_lea.vmem [#allocation2], %s246
        // Predicated region
        $region41: #{tpu_custom_call.1} parent=39 // pred_check
          %p248 = pneg %p46
        $region42: #{tpu_custom_call.1} parent=39 // pred_check_branch
          %250 = sbr.rel (%p248) target = $region44
        $region43: #{tpu_custom_call.1} parent=39 // pred_region
          %251 = dma.done %s244, 256
        $region44: #{tpu_custom_call.1} parent=39 // pred_fallthru
          _
        // Predicated region
        $region45: #{tpu_custom_call.1} parent=39 // pred_check
          %p252 = pneg %p67
        $region46: #{tpu_custom_call.1} parent=39 // pred_check_branch
          %254 = sbr.rel (%p252) target = $region48
        $region47: #{tpu_custom_call.1} parent=39 // pred_region
          %255 = dma.done [#allocation5], 128
        $region48: #{tpu_custom_call.1} parent=39 // pred_fallthru
          _
        // Predicated region
        $region49: #{tpu_custom_call.1} parent=39 // pred_check
          %p256 = pneg %p88
        $region50: #{tpu_custom_call.1} parent=39 // pred_check_branch
          %258 = sbr.rel (%p256) target = $region52
        $region51: #{tpu_custom_call.1} parent=39 // pred_region
          %259 = dma.done [#allocation6], 16
        $region52: #{tpu_custom_call.1} parent=39 // pred_fallthru
          _
        // Predicated region
        $region53: #{tpu_custom_call.1} parent=39 // pred_check
          %p260 = pneg %p109
        $region54: #{tpu_custom_call.1} parent=39 // pred_check_branch
          %262 = sbr.rel (%p260) target = $region56
        $region55: #{tpu_custom_call.1} parent=39 // pred_region
          %263 = dma.done [#allocation10], 128
        $region56: #{tpu_custom_call.1} parent=39 // pred_fallthru
          _
        // Predicated region
        $region57: #{tpu_custom_call.1} parent=39 // pred_check
          %p264 = pneg %p130
        $region58: #{tpu_custom_call.1} parent=39 // pred_check_branch
          %266 = sbr.rel (%p264) target = $region60
        $region59: #{tpu_custom_call.1} parent=39 // pred_region
          %267 = dma.done [#allocation10], 16
        $region60: #{tpu_custom_call.1} parent=39 // pred_fallthru
          _
        %268 = sfence
        %s269 = sand.u32 %s33, 1
        %s270 = scalar_lea.sflag [#allocation3], %s269
        %s271 = sand.u32 %s33, 1
        %s272 = smul.addr %s271, 16
        %s273 = scalar_lea.vmem [#allocation2], %s272
        %p274 = pneg %p46
        %p275 = pneg %p43
        %p276 = pneg %p67
        %p277 = pneg %p64
        %p278 = pneg %p88
        %p279 = pneg %p85
        %p280 = pneg %p109
        %p281 = pneg %p106
        %p282 = pneg %p130
        %p283 = pneg %p127
        %p284 = pneg %p156
        %p285 = pneg %p153
        %s286 = sand.u32 %s143, 1
        %s287 = scalar_lea.sflag [#allocation4], %s286
        %s288 = sand.u32 %s143, 1
        %s289 = smul.addr %s288, 16
        %s290 = scalar_lea.vmem [#allocation12], %s289
        %s291 = smul.u32 2, %s25
        %s292 = smul.u32 2, %s25
        %v293 = vld [vmem:[%s247] sm:$0x3f]
        %v294 = vld [vmem:[%s247 + $0x8] sm:$0x3f]
        %s295 = sld [smem:[#allocation7]]
        %v296 = vstv %s295
        %v297 = vmul.f32 %v293, %v296
        %v298 = vmul.f32 %v294, %v296
        %s299 = sld [smem:[#allocation7 + $0x1]]
        %v300 = vstv %s299
        %v301 = vmul.f32 %v293, %v300
        %v302 = vmul.f32 %v294, %v300
        %v305 = vrot.slane %v301, 1
        %v306 = vrot.slane %v302, 1
        %v309 = vadd.f32 %v297, %v305
        %v310 = vadd.f32 %v298, %v306
        %s311 = sld [smem:[#allocation7 + $0x2]]
        %v312 = vstv %s311
        %v313 = vmul.f32 %v293, %v312
        %v314 = vmul.f32 %v294, %v312
        %v317 = vrot.slane %v313, 2
        %v318 = vrot.slane %v314, 2
        %v321 = vadd.f32 %v309, %v317
        %v322 = vadd.f32 %v310, %v318
        %s323 = sld [smem:[#allocation7 + $0x3]]
        %v324 = vstv %s323
        %v325 = vmul.f32 %v293, %v324
        %v326 = vmul.f32 %v294, %v324
        %v329 = vrot.slane %v325, 3
        %v330 = vrot.slane %v326, 3
        %v333 = vadd.f32 %v321, %v329
        %v334 = vadd.f32 %v322, %v330
        %s335 = sld [smem:[#allocation7 + $0x4]]
        %v336 = vstv %s335
        %v337 = vmul.f32 %v293, %v336
        %v338 = vmul.f32 %v294, %v336
        %v341 = vrot.slane %v337, 4
        %v342 = vrot.slane %v338, 4
        %v345 = vadd.f32 %v333, %v341
        %v346 = vadd.f32 %v334, %v342
        %s347 = sld [smem:[#allocation7 + $0x5]]
        %v348 = vstv %s347
        %v349 = vmul.f32 %v293, %v348
        %v350 = vmul.f32 %v294, %v348
        %v353 = vrot.slane %v349, 5
        %v354 = vrot.slane %v350, 5
        %v357 = vadd.f32 %v345, %v353
        %v358 = vadd.f32 %v346, %v354
        %s359 = sld [smem:[#allocation8]]
        %v360 = vstv %s359
        %v361 = vadd.f32 %v357, %v360
        %v362 = vadd.f32 %v358, %v360
        %v363 = vtanh.pop %v361
        %v364 = vtanh.pop %v362
        %s365 = sld [smem:[#allocation7 + $0x80]]
        %v366 = vstv %s365
        %v367 = vmul.f32 %v293, %v366
        %v368 = vmul.f32 %v294, %v366
        %s369 = sld [smem:[#allocation7 + $0x81]]
        %v370 = vstv %s369
        %v371 = vmul.f32 %v293, %v370
        %v372 = vmul.f32 %v294, %v370
        %v375 = vrot.slane %v371, 1
        %v376 = vrot.slane %v372, 1
        %v379 = vadd.f32 %v367, %v375
        %v380 = vadd.f32 %v368, %v376
        %s381 = sld [smem:[#allocation7 + $0x82]]
        %v382 = vstv %s381
        %v383 = vmul.f32 %v293, %v382
        %v384 = vmul.f32 %v294, %v382
        %v387 = vrot.slane %v383, 2
        %v388 = vrot.slane %v384, 2
        %v391 = vadd.f32 %v379, %v387
        %v392 = vadd.f32 %v380, %v388
        %s393 = sld [smem:[#allocation7 + $0x83]]
        %v394 = vstv %s393
        %v395 = vmul.f32 %v293, %v394
        %v396 = vmul.f32 %v294, %v394
        %v399 = vrot.slane %v395, 3
        %v400 = vrot.slane %v396, 3
        %v403 = vadd.f32 %v391, %v399
        %v404 = vadd.f32 %v392, %v400
        %s405 = sld [smem:[#allocation7 + $0x84]]
        %v406 = vstv %s405
        %v407 = vmul.f32 %v293, %v406
        %v408 = vmul.f32 %v294, %v406
        %v411 = vrot.slane %v407, 4
        %v412 = vrot.slane %v408, 4
        %v415 = vadd.f32 %v403, %v411
        %v416 = vadd.f32 %v404, %v412
        %s417 = sld [smem:[#allocation7 + $0x85]]
        %v418 = vstv %s417
        %v419 = vmul.f32 %v293, %v418
        %v420 = vmul.f32 %v294, %v418
        %v423 = vrot.slane %v419, 5
        %v424 = vrot.slane %v420, 5
        %v427 = vadd.f32 %v415, %v423
        %v428 = vadd.f32 %v416, %v424
        %s429 = sld [smem:[#allocation8 + $0x1]]
        %v430 = vstv %s429
        %v431 = vadd.f32 %v427, %v430
        %v432 = vadd.f32 %v428, %v430
        %v433 = vtanh.pop %v431
        %v434 = vtanh.pop %v432
        %s435 = sld [smem:[#allocation7 + $0x100]]
        %v436 = vstv %s435
        %v437 = vmul.f32 %v293, %v436
        %v438 = vmul.f32 %v294, %v436
        %s439 = sld [smem:[#allocation7 + $0x101]]
        %v440 = vstv %s439
        %v441 = vmul.f32 %v293, %v440
        %v442 = vmul.f32 %v294, %v440
        %v445 = vrot.slane %v441, 1
        %v446 = vrot.slane %v442, 1
        %v449 = vadd.f32 %v437, %v445
        %v450 = vadd.f32 %v438, %v446
        %s451 = sld [smem:[#allocation7 + $0x102]]
        %v452 = vstv %s451
        %v453 = vmul.f32 %v293, %v452
        %v454 = vmul.f32 %v294, %v452
        %v457 = vrot.slane %v453, 2
        %v458 = vrot.slane %v454, 2
        %v461 = vadd.f32 %v449, %v457
        %v462 = vadd.f32 %v450, %v458
        %s463 = sld [smem:[#allocation7 + $0x103]]
        %v464 = vstv %s463
        %v465 = vmul.f32 %v293, %v464
        %v466 = vmul.f32 %v294, %v464
        %v469 = vrot.slane %v465, 3
        %v470 = vrot.slane %v466, 3
        %v473 = vadd.f32 %v461, %v469
        %v474 = vadd.f32 %v462, %v470
        %s475 = sld [smem:[#allocation7 + $0x104]]
        %v476 = vstv %s475
        %v477 = vmul.f32 %v293, %v476
        %v478 = vmul.f32 %v294, %v476
        %v481 = vrot.slane %v477, 4
        %v482 = vrot.slane %v478, 4
        %v485 = vadd.f32 %v473, %v481
        %v486 = vadd.f32 %v474, %v482
        %s487 = sld [smem:[#allocation7 + $0x105]]
        %v488 = vstv %s487
        %v489 = vmul.f32 %v293, %v488
        %v490 = vmul.f32 %v294, %v488
        %v493 = vrot.slane %v489, 5
        %v494 = vrot.slane %v490, 5
        %v497 = vadd.f32 %v485, %v493
        %v498 = vadd.f32 %v486, %v494
        %s499 = sld [smem:[#allocation8 + $0x2]]
        %v500 = vstv %s499
        %v501 = vadd.f32 %v497, %v500
        %v502 = vadd.f32 %v498, %v500
        %v503 = vtanh.pop %v501
        %v504 = vtanh.pop %v502
        %s505 = sld [smem:[#allocation7 + $0x180]]
        %v506 = vstv %s505
        %v507 = vmul.f32 %v293, %v506
        %v508 = vmul.f32 %v294, %v506
        %s509 = sld [smem:[#allocation7 + $0x181]]
        %v510 = vstv %s509
        %v511 = vmul.f32 %v293, %v510
        %v512 = vmul.f32 %v294, %v510
        %v515 = vrot.slane %v511, 1
        %v516 = vrot.slane %v512, 1
        %v519 = vadd.f32 %v507, %v515
        %v520 = vadd.f32 %v508, %v516
        %s521 = sld [smem:[#allocation7 + $0x182]]
        %v522 = vstv %s521
        %v523 = vmul.f32 %v293, %v522
        %v524 = vmul.f32 %v294, %v522
        %v527 = vrot.slane %v523, 2
        %v528 = vrot.slane %v524, 2
        %v531 = vadd.f32 %v519, %v527
        %v532 = vadd.f32 %v520, %v528
        %s533 = sld [smem:[#allocation7 + $0x183]]
        %v534 = vstv %s533
        %v535 = vmul.f32 %v293, %v534
        %v536 = vmul.f32 %v294, %v534
        %v539 = vrot.slane %v535, 3
        %v540 = vrot.slane %v536, 3
        %v543 = vadd.f32 %v531, %v539
        %v544 = vadd.f32 %v532, %v540
        %s545 = sld [smem:[#allocation7 + $0x184]]
        %v546 = vstv %s545
        %v547 = vmul.f32 %v293, %v546
        %v548 = vmul.f32 %v294, %v546
        %v551 = vrot.slane %v547, 4
        %v552 = vrot.slane %v548, 4
        %v555 = vadd.f32 %v543, %v551
        %v556 = vadd.f32 %v544, %v552
        %s557 = sld [smem:[#allocation7 + $0x185]]
        %v558 = vstv %s557
        %v559 = vmul.f32 %v293, %v558
        %v560 = vmul.f32 %v294, %v558
        %v563 = vrot.slane %v559, 5
        %v564 = vrot.slane %v560, 5
        %v567 = vadd.f32 %v555, %v563
        %v568 = vadd.f32 %v556, %v564
        %s569 = sld [smem:[#allocation8 + $0x3]]
        %v570 = vstv %s569
        %v571 = vadd.f32 %v567, %v570
        %v572 = vadd.f32 %v568, %v570
        %v573 = vtanh.pop %v571
        %v574 = vtanh.pop %v572
        %s575 = sld [smem:[#allocation7 + $0x200]]
        %v576 = vstv %s575
        %v577 = vmul.f32 %v293, %v576
        %v578 = vmul.f32 %v294, %v576
        %s579 = sld [smem:[#allocation7 + $0x201]]
        %v580 = vstv %s579
        %v581 = vmul.f32 %v293, %v580
        %v582 = vmul.f32 %v294, %v580
        %v585 = vrot.slane %v581, 1
        %v586 = vrot.slane %v582, 1
        %v589 = vadd.f32 %v577, %v585
        %v590 = vadd.f32 %v578, %v586
        %s591 = sld [smem:[#allocation7 + $0x202]]
        %v592 = vstv %s591
        %v593 = vmul.f32 %v293, %v592
        %v594 = vmul.f32 %v294, %v592
        %v597 = vrot.slane %v593, 2
        %v598 = vrot.slane %v594, 2
        %v601 = vadd.f32 %v589, %v597
        %v602 = vadd.f32 %v590, %v598
        %s603 = sld [smem:[#allocation7 + $0x203]]
        %v604 = vstv %s603
        %v605 = vmul.f32 %v293, %v604
        %v606 = vmul.f32 %v294, %v604
        %v609 = vrot.slane %v605, 3
        %v610 = vrot.slane %v606, 3
        %v613 = vadd.f32 %v601, %v609
        %v614 = vadd.f32 %v602, %v610
        %s615 = sld [smem:[#allocation7 + $0x204]]
        %v616 = vstv %s615
        %v617 = vmul.f32 %v293, %v616
        %v618 = vmul.f32 %v294, %v616
        %v621 = vrot.slane %v617, 4
        %v622 = vrot.slane %v618, 4
        %v625 = vadd.f32 %v613, %v621
        %v626 = vadd.f32 %v614, %v622
        %s627 = sld [smem:[#allocation7 + $0x205]]
        %v628 = vstv %s627
        %v629 = vmul.f32 %v293, %v628
        %v630 = vmul.f32 %v294, %v628
        %v633 = vrot.slane %v629, 5
        %v634 = vrot.slane %v630, 5
        %v637 = vadd.f32 %v625, %v633
        %v638 = vadd.f32 %v626, %v634
        %s639 = sld [smem:[#allocation8 + $0x4]]
        %v640 = vstv %s639
        %v641 = vadd.f32 %v637, %v640
        %v642 = vadd.f32 %v638, %v640
        %v643 = vtanh.pop %v641
        %v644 = vtanh.pop %v642
        %s645 = sld [smem:[#allocation7 + $0x280]]
        %v646 = vstv %s645
        %v647 = vmul.f32 %v293, %v646
        %v648 = vmul.f32 %v294, %v646
        %s649 = sld [smem:[#allocation7 + $0x281]]
        %v650 = vstv %s649
        %v651 = vmul.f32 %v293, %v650
        %v652 = vmul.f32 %v294, %v650
        %v655 = vrot.slane %v651, 1
        %v656 = vrot.slane %v652, 1
        %v659 = vadd.f32 %v647, %v655
        %v660 = vadd.f32 %v648, %v656
        %s661 = sld [smem:[#allocation7 + $0x282]]
        %v662 = vstv %s661
        %v663 = vmul.f32 %v293, %v662
        %v664 = vmul.f32 %v294, %v662
        %v667 = vrot.slane %v663, 2
        %v668 = vrot.slane %v664, 2
        %v671 = vadd.f32 %v659, %v667
        %v672 = vadd.f32 %v660, %v668
        %s673 = sld [smem:[#allocation7 + $0x283]]
        %v674 = vstv %s673
        %v675 = vmul.f32 %v293, %v674
        %v676 = vmul.f32 %v294, %v674
        %v679 = vrot.slane %v675, 3
        %v680 = vrot.slane %v676, 3
        %v683 = vadd.f32 %v671, %v679
        %v684 = vadd.f32 %v672, %v680
        %s685 = sld [smem:[#allocation7 + $0x284]]
        %v686 = vstv %s685
        %v687 = vmul.f32 %v293, %v686
        %v688 = vmul.f32 %v294, %v686
        %v691 = vrot.slane %v687, 4
        %v692 = vrot.slane %v688, 4
        %v695 = vadd.f32 %v683, %v691
        %v696 = vadd.f32 %v684, %v692
        %s697 = sld [smem:[#allocation7 + $0x285]]
        %v698 = vstv %s697
        %v699 = vmul.f32 %v293, %v698
        %v700 = vmul.f32 %v294, %v698
        %v703 = vrot.slane %v699, 5
        %v704 = vrot.slane %v700, 5
        %v707 = vadd.f32 %v695, %v703
        %v708 = vadd.f32 %v696, %v704
        %s709 = sld [smem:[#allocation8 + $0x5]]
        %v710 = vstv %s709
        %v711 = vadd.f32 %v707, %v710
        %v712 = vadd.f32 %v708, %v710
        %v713 = vtanh.pop %v711
        %v714 = vtanh.pop %v712
        %s715 = sld [smem:[#allocation9]]
        %v716 = vstv %s715
        %v717 = vmul.f32 %v363, %v716
        %v718 = vmul.f32 %v364, %v716
        %s719 = sld [smem:[#allocation9 + $0x1]]
        %v720 = vstv %s719
        %v721 = vmul.f32 %v433, %v720
        %v722 = vmul.f32 %v434, %v720
        %v723 = vadd.f32 %v717, %v721
        %v724 = vadd.f32 %v718, %v722
        %s725 = sld [smem:[#allocation9 + $0x2]]
        %v726 = vstv %s725
        %v727 = vmul.f32 %v503, %v726
        %v728 = vmul.f32 %v504, %v726
        %v729 = vadd.f32 %v723, %v727
        %v730 = vadd.f32 %v724, %v728
        %s731 = sld [smem:[#allocation9 + $0x3]]
        %v732 = vstv %s731
        %v733 = vmul.f32 %v573, %v732
        %v734 = vmul.f32 %v574, %v732
        %v735 = vadd.f32 %v729, %v733
        %v736 = vadd.f32 %v730, %v734
        %s737 = sld [smem:[#allocation9 + $0x4]]
        %v738 = vstv %s737
        %v739 = vmul.f32 %v643, %v738
        %v740 = vmul.f32 %v644, %v738
        %v741 = vadd.f32 %v735, %v739
        %v742 = vadd.f32 %v736, %v740
        %s743 = sld [smem:[#allocation9 + $0x5]]
        %v744 = vstv %s743
        %v745 = vmul.f32 %v713, %v744
        %v746 = vmul.f32 %v714, %v744
        %v747 = vadd.f32 %v741, %v745
        %v748 = vadd.f32 %v742, %v746
        %s749 = sld [smem:[#allocation11]]
        %v750 = vstv %s749
        %v751 = vadd.f32 %v747, %v750
        %v752 = vadd.f32 %v748, %v750
        %v753 = vxor.u32 %v751, 2147483648
        %v754 = vxor.u32 %v752, 2147483648
        %v755 = vmul.f32 %v753, 1.442695
        %v756 = vpow.pop %v755
        %v757 = vmul.f32 %v754, 1.442695
        %v758 = vpow.pop %v757
        %v759 = vadd.f32 %v756, 1.0
        %v760 = vadd.f32 %v758, 1.0
        %v761 = vrcp.pop %v759
        %v762 = vmul.f32 1.0, %v761
        %v763 = vrcp.pop %v760
        %v764 = vmul.f32 1.0, %v763
        %s765 = sld [smem:[#allocation9 + $0x80]]
        %v766 = vstv %s765
        %v767 = vmul.f32 %v363, %v766
        %v768 = vmul.f32 %v364, %v766
        %s769 = sld [smem:[#allocation9 + $0x81]]
        %v770 = vstv %s769
        %v771 = vmul.f32 %v433, %v770
        %v772 = vmul.f32 %v434, %v770
        %v773 = vadd.f32 %v767, %v771
        %v774 = vadd.f32 %v768, %v772
        %s775 = sld [smem:[#allocation9 + $0x82]]
        %v776 = vstv %s775
        %v777 = vmul.f32 %v503, %v776
        %v778 = vmul.f32 %v504, %v776
        %v779 = vadd.f32 %v773, %v777
        %v780 = vadd.f32 %v774, %v778
        %s781 = sld [smem:[#allocation9 + $0x83]]
        %v782 = vstv %s781
        %v783 = vmul.f32 %v573, %v782
        %v784 = vmul.f32 %v574, %v782
        %v785 = vadd.f32 %v779, %v783
        %v786 = vadd.f32 %v780, %v784
        %s787 = sld [smem:[#allocation9 + $0x84]]
        %v788 = vstv %s787
        %v789 = vmul.f32 %v643, %v788
        %v790 = vmul.f32 %v644, %v788
        %v791 = vadd.f32 %v785, %v789
        %v792 = vadd.f32 %v786, %v790
        %s793 = sld [smem:[#allocation9 + $0x85]]
        %v794 = vstv %s793
        %v795 = vmul.f32 %v713, %v794
        %v796 = vmul.f32 %v714, %v794
        %v797 = vadd.f32 %v791, %v795
        %v798 = vadd.f32 %v792, %v796
        %s799 = sld [smem:[#allocation11 + $0x1]]
        %v800 = vstv %s799
        %v801 = vadd.f32 %v797, %v800
        %v802 = vadd.f32 %v798, %v800
        %v803 = vxor.u32 %v801, 2147483648
        %v804 = vxor.u32 %v802, 2147483648
        %v805 = vmul.f32 %v803, 1.442695
        %v806 = vpow.pop %v805
        %v807 = vmul.f32 %v804, 1.442695
        %v808 = vpow.pop %v807
        %v809 = vadd.f32 %v806, 1.0
        %v810 = vadd.f32 %v808, 1.0
        %v811 = vrcp.pop %v809
        %v812 = vmul.f32 1.0, %v811
        %v813 = vrcp.pop %v810
        %v814 = vmul.f32 1.0, %v813
        %s815 = sld [smem:[#allocation9 + $0x100]]
        %v816 = vstv %s815
        %v817 = vmul.f32 %v363, %v816
        %v818 = vmul.f32 %v364, %v816
        %s819 = sld [smem:[#allocation9 + $0x101]]
        %v820 = vstv %s819
        %v821 = vmul.f32 %v433, %v820
        %v822 = vmul.f32 %v434, %v820
        %v823 = vadd.f32 %v817, %v821
        %v824 = vadd.f32 %v818, %v822
        %s825 = sld [smem:[#allocation9 + $0x102]]
        %v826 = vstv %s825
        %v827 = vmul.f32 %v503, %v826
        %v828 = vmul.f32 %v504, %v826
        %v829 = vadd.f32 %v823, %v827
        %v830 = vadd.f32 %v824, %v828
        %s831 = sld [smem:[#allocation9 + $0x103]]
        %v832 = vstv %s831
        %v833 = vmul.f32 %v573, %v832
        %v834 = vmul.f32 %v574, %v832
        %v835 = vadd.f32 %v829, %v833
        %v836 = vadd.f32 %v830, %v834
        %s837 = sld [smem:[#allocation9 + $0x104]]
        %v838 = vstv %s837
        %v839 = vmul.f32 %v643, %v838
        %v840 = vmul.f32 %v644, %v838
        %v841 = vadd.f32 %v835, %v839
        %v842 = vadd.f32 %v836, %v840
        %s843 = sld [smem:[#allocation9 + $0x105]]
        %v844 = vstv %s843
        %v845 = vmul.f32 %v713, %v844
        %v846 = vmul.f32 %v714, %v844
        %v847 = vadd.f32 %v841, %v845
        %v848 = vadd.f32 %v842, %v846
        %s849 = sld [smem:[#allocation11 + $0x2]]
        %v850 = vstv %s849
        %v851 = vadd.f32 %v847, %v850
        %v852 = vadd.f32 %v848, %v850
        %v853 = vxor.u32 %v851, 2147483648
        %v854 = vxor.u32 %v852, 2147483648
        %v855 = vmul.f32 %v853, 1.442695
        %v856 = vpow.pop %v855
        %v857 = vmul.f32 %v854, 1.442695
        %v858 = vpow.pop %v857
        %v859 = vadd.f32 %v856, 1.0
        %v860 = vadd.f32 %v858, 1.0
        %v861 = vrcp.pop %v859
        %v862 = vmul.f32 1.0, %v861
        %v863 = vrcp.pop %v860
        %v864 = vmul.f32 1.0, %v863
        %s865 = sld [smem:[#allocation9 + $0x180]]
        %v866 = vstv %s865
        %v867 = vmul.f32 %v363, %v866
        %v868 = vmul.f32 %v364, %v866
        %s869 = sld [smem:[#allocation9 + $0x181]]
        %v870 = vstv %s869
        %v871 = vmul.f32 %v433, %v870
        %v872 = vmul.f32 %v434, %v870
        %v873 = vadd.f32 %v867, %v871
        %v874 = vadd.f32 %v868, %v872
        %s875 = sld [smem:[#allocation9 + $0x182]]
        %v876 = vstv %s875
        %v877 = vmul.f32 %v503, %v876
        %v878 = vmul.f32 %v504, %v876
        %v879 = vadd.f32 %v873, %v877
        %v880 = vadd.f32 %v874, %v878
        %s881 = sld [smem:[#allocation9 + $0x183]]
        %v882 = vstv %s881
        %v883 = vmul.f32 %v573, %v882
        %v884 = vmul.f32 %v574, %v882
        %v885 = vadd.f32 %v879, %v883
        %v886 = vadd.f32 %v880, %v884
        %s887 = sld [smem:[#allocation9 + $0x184]]
        %v888 = vstv %s887
        %v889 = vmul.f32 %v643, %v888
        %v890 = vmul.f32 %v644, %v888
        %v891 = vadd.f32 %v885, %v889
        %v892 = vadd.f32 %v886, %v890
        %s893 = sld [smem:[#allocation9 + $0x185]]
        %v894 = vstv %s893
        %v895 = vmul.f32 %v713, %v894
        %v896 = vmul.f32 %v714, %v894
        %v897 = vadd.f32 %v891, %v895
        %v898 = vadd.f32 %v892, %v896
        %s899 = sld [smem:[#allocation11 + $0x3]]
        %v900 = vstv %s899
        %v901 = vadd.f32 %v897, %v900
        %v902 = vadd.f32 %v898, %v900
        %v903 = vxor.u32 %v901, 2147483648
        %v904 = vxor.u32 %v902, 2147483648
        %v905 = vmul.f32 %v903, 1.442695
        %v906 = vpow.pop %v905
        %v907 = vmul.f32 %v904, 1.442695
        %v908 = vpow.pop %v907
        %v909 = vadd.f32 %v906, 1.0
        %v910 = vadd.f32 %v908, 1.0
        %v911 = vrcp.pop %v909
        %v912 = vmul.f32 1.0, %v911
        %v913 = vrcp.pop %v910
        %v914 = vmul.f32 1.0, %v913
        %s915 = sld [smem:[#allocation9 + $0x200]]
        %v916 = vstv %s915
        %v917 = vmul.f32 %v363, %v916
        %v918 = vmul.f32 %v364, %v916
        %s919 = sld [smem:[#allocation9 + $0x201]]
        %v920 = vstv %s919
        %v921 = vmul.f32 %v433, %v920
        %v922 = vmul.f32 %v434, %v920
        %v923 = vadd.f32 %v917, %v921
        %v924 = vadd.f32 %v918, %v922
        %s925 = sld [smem:[#allocation9 + $0x202]]
        %v926 = vstv %s925
        %v927 = vmul.f32 %v503, %v926
        %v928 = vmul.f32 %v504, %v926
        %v929 = vadd.f32 %v923, %v927
        %v930 = vadd.f32 %v924, %v928
        %s931 = sld [smem:[#allocation9 + $0x203]]
        %v932 = vstv %s931
        %v933 = vmul.f32 %v573, %v932
        %v934 = vmul.f32 %v574, %v932
        %v935 = vadd.f32 %v929, %v933
        %v936 = vadd.f32 %v930, %v934
        %s937 = sld [smem:[#allocation9 + $0x204]]
        %v938 = vstv %s937
        %v939 = vmul.f32 %v643, %v938
        %v940 = vmul.f32 %v644, %v938
        %v941 = vadd.f32 %v935, %v939
        %v942 = vadd.f32 %v936, %v940
        %s943 = sld [smem:[#allocation9 + $0x205]]
        %v944 = vstv %s943
        %v945 = vmul.f32 %v713, %v944
        %v946 = vmul.f32 %v714, %v944
        %v947 = vadd.f32 %v941, %v945
        %v948 = vadd.f32 %v942, %v946
        %s949 = sld [smem:[#allocation11 + $0x4]]
        %v950 = vstv %s949
        %v951 = vadd.f32 %v947, %v950
        %v952 = vadd.f32 %v948, %v950
        %v953 = vxor.u32 %v951, 2147483648
        %v954 = vxor.u32 %v952, 2147483648
        %v955 = vmul.f32 %v953, 1.442695
        %v956 = vpow.pop %v955
        %v957 = vmul.f32 %v954, 1.442695
        %v958 = vpow.pop %v957
        %v959 = vadd.f32 %v956, 1.0
        %v960 = vadd.f32 %v958, 1.0
        %v961 = vrcp.pop %v959
        %v962 = vmul.f32 1.0, %v961
        %v963 = vrcp.pop %v960
        %v964 = vmul.f32 1.0, %v963
        %v967 = vrot.slane %v812, 7
        %v968 = vrot.slane %v814, 7
        %v973 = vrot.slane %v862, 6
        %v974 = vrot.slane %v864, 6
        %v979 = vrot.slane %v912, 5
        %v980 = vrot.slane %v914, 5
        %v985 = vrot.slane %v962, 4
        %v986 = vrot.slane %v964, 4
        %vm989 = vcmask 1040384
        %v990 = vsel %vm989, %v762, %v967
        %v991 = vsel %vm989, %v764, %v968
        %vm992 = vcmask 1041408
        %v993 = vsel %vm992, %v990, %v973
        %v994 = vsel %vm992, %v991, %v974
        %vm995 = vcmask 1042432
        %v996 = vsel %vm995, %v993, %v979
        %v997 = vsel %vm995, %v994, %v980
        %vm998 = vcmask 1043456
        %v999 = vsel %vm998, %v996, %v985
        %v1000 = vsel %vm998, %v997, %v986
        %1001 = vst [vmem:[%s290] sm:$0x1f] %v999
        %1002 = vst [vmem:[%s290 + $0x8] sm:$0x1f] %v1000
        %s1003 = sand.u32 %s143, 1
        %s1004 = scalar_lea.sflag [#allocation4], %s1003
        %s1005 = sand.u32 %s143, 1
        %s1006 = smul.addr %s1005, 16
        %s1007 = scalar_lea.vmem [#allocation12], %s1006
        // Predicated region
        $region61: #{tpu_custom_call.1} parent=39 // pred_check
          %p1008 = pneg %p153
        $region62: #{tpu_custom_call.1} parent=39 // pred_check_branch
          %1010 = sbr.rel (%p1008) target = $region64
        $region63: #{tpu_custom_call.1} parent=39 // pred_region
          %s1011 = smul.u32 2, %s25
          %s1013 = ssub.s32 256, 256
          %1014 = vsyncadd %s1004, %s1013
          %s1015 = smul.addr %s1011, 128
          %s1016 = scalar_lea.hbm %s5, %s1015
          %s1018 = sshll.u32 %s1007, 4
          %s1019 = int_to_ptr.vmem [resolvable:$true] %s1018
          %1021 = dma.vmem_to_hbm [thread:$0]  %s1019, 256, %s1016, %s1004
        $region64: #{tpu_custom_call.1} parent=39 // pred_fallthru
          _
      $region40: #{tpu_custom_call.1} parent=5 // pred_fallthru
        _
      %p1022 = scmp.le.s32.totalorder 2, %s20
      // Predicated region
      $region65: #{tpu_custom_call.1} parent=5 // pred_check
        %p1023 = pneg %p1022
      $region66: #{tpu_custom_call.1} parent=5 // pred_check_branch
        %1025 = sbr.rel (%p1023) target = $region68
      $region67: #{tpu_custom_call.1} parent=5 // pred_region
        %s1026 = ssub.s32 %s20, 2
        // Predicated region
        $region69: #{tpu_custom_call.1} parent=67 // pred_check
          %p1027 = pneg %p159
        $region70: #{tpu_custom_call.1} parent=67 // pred_check_branch
          %1029 = sbr.rel (%p1027) target = $region72
        $region71: #{tpu_custom_call.1} parent=67 // pred_region
          %s1030 = sand.u32 %s144, 1
          %s1031 = scalar_lea.sflag [#allocation4], %s1030
          %s1032 = sand.u32 %s144, 1
          %s1033 = smul.addr %s1032, 16
          %s1034 = scalar_lea.vmem [#allocation12], %s1033
          %1035 = dma.done %s1031, 256
        $region72: #{tpu_custom_call.1} parent=67 // pred_fallthru
          _
      $region68: #{tpu_custom_call.1} parent=5 // pred_fallthru
        _
    $region6: #{tpu_custom_call.1} parent=1 // loop_footer
      %s24 = sadd.s32 1, %s20
    $region7: #{tpu_custom_call.1} parent=1 // loop_footer_branch
      %19 = sbr.rel target = $region3
    $region8: #{tpu_custom_call.1} parent=1 // loop_exit
      _
    %1036 = vsyncpa [#allocation3], 1
    %s1037 = scalar_lea.sflag [#allocation3], 1
    %1038 = vsyncpa %s1037, 1
    %1039 = vsyncpa [#allocation4], 1
    %s1040 = scalar_lea.sflag [#allocation4], 1
    %1041 = vsyncpa %s1040, 1
    %1042 = vsyncpa [#allocation5], 1
    %s1043 = scalar_lea.sflag [#allocation5], 1
    %1044 = vsyncpa %s1043, 1
    %1045 = vsyncpa [#allocation6], 1
    %s1046 = scalar_lea.sflag [#allocation6], 1
    %1047 = vsyncpa %s1046, 1
    %1048 = vsyncpa [#allocation10], 1

</llo_original>
